<compile_context>
chip_gen: v5e
topology: v5e:2x2
jax: 0.10.0
libtpu: 0.0.40
codegen_flags: <defaults>
</compile_context>

<pallas_src>
import jax
import jax.numpy as jnp
from jax.experimental import pallas as pl
from jax.experimental.pallas import tpu as pltpu

IN_F = 10
HID = 32
OUT_F = 1

# Batch tile: full batch for small B; 512 rows otherwise (near HBM roofline
# for mem-bound bodies; 512-row f32 tiles are tiny even in v7x's 64 MiB VMEM).
MAX_TILE_B = 512


def mlp_kernel(x_ref, w1_ref, b1_ref, w2t_ref, b2_ref, o_ref):
    # Hidden layer: (TILE_B, 10) @ (10, 32) + (1, 32) -- single MXU pass.
    h = jnp.dot(x_ref[...], w1_ref[...], preferred_element_type=jnp.float32)
    h = h + b1_ref[...]
    # Sigmoid: exp goes to the EUP slot, remaining ops on the VPU.
    h = jax.nn.sigmoid(h)
    # Output layer as VPU mul + XLU lane-reduce against lane-dense (1, 32)
    # w2^T instead of an N=1 MXU matmul.
    out = jnp.sum(h * w2t_ref[...], axis=-1, keepdims=True)
    # b2 is a scalar living in SMEM.
    out = out + b2_ref[0, 0]
    o_ref[...] = out.astype(o_ref.dtype)


def mymodel_forward(x, w1, b1, w2, b2):
    """x: (B, 10); w1: (10, 32); b1: (1, 32); w2: (32, 1); b2: (1, 1)."""
    B = x.shape[0]
    tile_b = B if B <= MAX_TILE_B else MAX_TILE_B
    grid = (pl.cdiv(B, tile_b),)

    w2t = w2.T.reshape(1, HID)      # lane-dense (1, 32)
    b2s = b2.reshape(1, 1)          # scalar -> SMEM

    return pl.pallas_call(
        mlp_kernel,
        out_shape=jax.ShapeDtypeStruct((B, OUT_F), jnp.float32),
        grid=grid,
        in_specs=[
            pl.BlockSpec((tile_b, IN_F), lambda i: (i, 0)),      # x: tiled over batch
            pl.BlockSpec((IN_F, HID), lambda i: (0, 0)),         # w1: resident
            pl.BlockSpec((1, HID), lambda i: (0, 0)),            # b1: resident
            pl.BlockSpec((1, HID), lambda i: (0, 0)),            # w2^T: resident
            pl.BlockSpec(memory_space=pltpu.MemorySpace.SMEM),   # b2: scalar in SMEM
        ],
        out_specs=pl.BlockSpec((tile_b, OUT_F), lambda i: (i, 0)),
        compiler_params=pltpu.CompilerParams(
            dimension_semantics=("parallel",),  # megacore sharding on v7x
        ),
    )(x, w1, b1, w2t, b2s)


def reference_forward(x, w1, b1, w2, b2):
    h = jax.nn.sigmoid(x @ w1 + b1)
    return h @ w2 + b2


if __name__ == "__main__":
    key = jax.random.PRNGKey(0)
    kx, k1, kb1, k2, kb2 = jax.random.split(key, 5)

    B = 8  # small batch
    x = jax.random.normal(kx, (B, IN_F), dtype=jnp.float32)

    # Deterministic parameter init (uniform, PyTorch default Linear init scale).
    w1 = jax.random.uniform(k1, (IN_F, HID), dtype=jnp.float32,
                            minval=-1.0 / (IN_F ** 0.5), maxval=1.0 / (IN_F ** 0.5))
    b1 = jax.random.uniform(kb1, (1, HID), dtype=jnp.float32,
                            minval=-1.0 / (IN_F ** 0.5), maxval=1.0 / (IN_F ** 0.5))
    w2 = jax.random.uniform(k2, (HID, OUT_F), dtype=jnp.float32,
                            minval=-1.0 / (HID ** 0.5), maxval=1.0 / (HID ** 0.5))
    b2 = jax.random.uniform(kb2, (1, OUT_F), dtype=jnp.float32,
                            minval=-1.0 / (HID ** 0.5), maxval=1.0 / (HID ** 0.5))

    out = mymodel_forward(x, w1, b1, w2, b2)
    out = jax.block_until_ready(out)

    ref = reference_forward(x, w1, b1, w2, b2)
    assert out.shape == (B, OUT_F)
    assert jnp.allclose(out, ref, atol=1e-5, rtol=1e-5), "mismatch vs reference"

    print("KERNEL_OK")
</pallas_src>

<mosaic_0001>
module attributes {stable_mosaic.version = 11 : i64} {
  func.func @mlp_kernel(%arg0: i32, %arg1: memref<8x10xf32, #tpu.memory_space<vmem>>, %arg2: memref<10x32xf32, #tpu.memory_space<vmem>>, %arg3: memref<1x32xf32, #tpu.memory_space<vmem>>, %arg4: memref<1x32xf32, #tpu.memory_space<vmem>>, %arg5: memref<1x1xf32, #tpu.memory_space<smem>>, %arg6: memref<8x1xf32, #tpu.memory_space<vmem>>) attributes {dimension_semantics = [#tpu.dimension_semantics<parallel>], iteration_bounds = array<i64: 1>, scalar_prefetch = 0 : i64, scratch_operands = 0 : i64, tpu.core_type = #tpu.core_type<tc>, window_params = [{transform_indices = @transform_0, window_bounds = array<i64: 8, 10>}, {pipeline_mode = #tpu.pipeline_mode<synchronous>, transform_indices = @transform_1, window_bounds = array<i64: 10, 32>}, {pipeline_mode = #tpu.pipeline_mode<synchronous>, transform_indices = @transform_2, window_bounds = array<i64: 1, 32>}, {pipeline_mode = #tpu.pipeline_mode<synchronous>, transform_indices = @transform_3, window_bounds = array<i64: 1, 32>}, {transform_indices = @transform_4, window_bounds = array<i64: 1, 1>}, {transform_indices = @transform_5, window_bounds = array<i64: 8, 1>}]} {
    %c0 = arith.constant 0 : index
    %c0_0 = arith.constant 0 : index
    %0 = vector.load %arg1[%c0, %c0_0] : memref<8x10xf32, #tpu.memory_space<vmem>>, vector<8x10xf32>
    %c0_1 = arith.constant 0 : index
    %c0_2 = arith.constant 0 : index
    %1 = vector.load %arg2[%c0_1, %c0_2] : memref<10x32xf32, #tpu.memory_space<vmem>>, vector<10x32xf32>
    %cst = arith.constant dense<0.000000e+00> : vector<8x32xf32>
    %2 = tpu.matmul %0, %1, %cst {dimension_numbers = #tpu.dot_dimension_numbers<[1], [0], [0], [1], [0, 0, 1, 1], [], []>} : vector<8x10xf32>, vector<10x32xf32>, vector<8x32xf32> -> vector<8x32xf32>
    %c0_3 = arith.constant 0 : index
    %c0_4 = arith.constant 0 : index
    %3 = vector.load %arg3[%c0_3, %c0_4] : memref<1x32xf32, #tpu.memory_space<vmem>>, vector<1x32xf32>
    %4 = vector.broadcast %3 : vector<1x32xf32> to vector<8x32xf32>
    %5 = arith.addf %2, %4 : vector<8x32xf32>
    %6 = arith.negf %5 : vector<8x32xf32>
    %7 = math.exp %6 : vector<8x32xf32>
    %cst_5 = arith.constant 1.000000e+00 : f32
    %8 = vector.broadcast %cst_5 : f32 to vector<8x32xf32>
    %9 = arith.addf %8, %7 : vector<8x32xf32>
    %10 = arith.divf %8, %9 : vector<8x32xf32>
    %c0_6 = arith.constant 0 : index
    %c0_7 = arith.constant 0 : index
    %11 = vector.load %arg4[%c0_6, %c0_7] : memref<1x32xf32, #tpu.memory_space<vmem>>, vector<1x32xf32>
    %12 = vector.broadcast %11 : vector<1x32xf32> to vector<8x32xf32>
    %13 = arith.mulf %10, %12 : vector<8x32xf32>
    %cst_8 = arith.constant dense<0.000000e+00> : vector<8xf32>
    %14 = vector.multi_reduction <add>, %13, %cst_8 [1] : vector<8x32xf32> to vector<8xf32>
    %15 = vector.shape_cast %14 : vector<8xf32> to vector<8x1xf32>
    %c0_9 = arith.constant 0 : index
    %c0_10 = arith.constant 0 : index
    %16 = memref.load %arg5[%c0_9, %c0_10] : memref<1x1xf32, #tpu.memory_space<smem>>
    %17 = vector.broadcast %16 : f32 to vector<8x1xf32>
    %18 = arith.addf %15, %17 : vector<8x1xf32>
    %c0_11 = arith.constant 0 : index
    %c0_12 = arith.constant 0 : index
    %19 = vector.load %arg6[%c0_11, %c0_12] : memref<8x1xf32, #tpu.memory_space<vmem>>, vector<8x1xf32>
    tpu.vector_store %arg6[%c0_11, %c0_12], %18 {strides = array<i32>} : memref<8x1xf32, #tpu.memory_space<vmem>>, vector<8x1xf32>,
    return
  }
  func.func @transform_0(%arg0: i32) -> (i32, i32) {
    %c0_i32 = arith.constant 0 : i32
    %c0_i32_0 = arith.constant 0 : i32
    return %arg0, %c0_i32 : i32, i32
  }
  func.func @transform_1(%arg0: i32) -> (i32, i32) {
    %c0_i32 = arith.constant 0 : i32
    %c0_i32_0 = arith.constant 0 : i32
    %c0_i32_1 = arith.constant 0 : i32
    return %c0_i32, %c0_i32_0 : i32, i32
  }
  func.func @transform_2(%arg0: i32) -> (i32, i32) {
    %c0_i32 = arith.constant 0 : i32
    %c0_i32_0 = arith.constant 0 : i32
    %c0_i32_1 = arith.constant 0 : i32
    return %c0_i32, %c0_i32_0 : i32, i32
  }
  func.func @transform_3(%arg0: i32) -> (i32, i32) {
    %c0_i32 = arith.constant 0 : i32
    %c0_i32_0 = arith.constant 0 : i32
    %c0_i32_1 = arith.constant 0 : i32
    return %c0_i32, %c0_i32_0 : i32, i32
  }
  func.func @transform_4(%arg0: i32) -> (i32, i32) {
    %c0_i32 = arith.constant 0 : i32
    %c0_i32_0 = arith.constant 0 : i32
    %c0_i32_1 = arith.constant 0 : i32
    return %c0_i32, %c0_i32_0 : i32, i32
  }
  func.func @transform_5(%arg0: i32) -> (i32, i32) {
    %c0_i32 = arith.constant 0 : i32
    %c0_i32_0 = arith.constant 0 : i32
    return %arg0, %c0_i32 : i32, i32
  }
}

</mosaic_0001>

<llo_original>
// kernel: tpu_custom_call.1
$region0: #{tpu_custom_call.1}
  #allocation0 [shape = 'u32[]', space=smem, size = 0x4, offset = 0x4, fixed_abs, tag = 'smem constant byte address 0x4 - core index']
  #allocation1 [shape = 'u32[72,128]{1,0:T(1,128)}', space=vmem, size = 0x9000, scoped, tag = 'internal scratch']
  #allocation2 [shape = 'f32[1,1]{1,0:T(1,128)S(6)}', space=smem, size = 0x200, scoped, tag = 'scoped memory for tpu_custom_call.1']
  %s0 = inlined_call_operand.hbm [shape: f32[8,10], index: 0, kind: input, shape index: {}]
  %s1 = inlined_call_operand.hbm [shape: f32[10,32], index: 1, kind: input, shape index: {}]
  %s2 = inlined_call_operand.vmem [shape: f32[1,32], index: 2, kind: input, shape index: {}]
  %s3 = inlined_call_operand.vmem [shape: f32[1,32], index: 3, kind: input, shape index: {}]
  %s4 = inlined_call_operand.<no memory space> [shape: f32[1,1], index: 4, kind: input, shape index: {}]
  %s5 = inlined_call_operand.vmem [shape: f32[8,1], index: 5, kind: output, shape index: {}]
  %s6 = sld [smem:[#allocation0]]
  $region38: #{tpu_custom_call.1} parent=0
    _
  %s8 = ssub.s32 1, %s6
  %s9 = scalar_select 0, %s8, %s6
  %10 = sst [smem:[#allocation2]] %s4
  $region1: #{tpu_custom_call.1} parent=0
    #allocation3 [shape = 'u8[4096]{0}', space=vmem, size = 0x1000, scoped, tag = 'input window, operand 0, single buffered']
    #allocation4 [shape = 's32[1]{0}', space=sflag, size = 0x4, scoped, tag = 'scoped memory for tpu_custom_call.1']
    #allocation5 [shape = 'u8[8192]{0}', space=vmem, size = 0x2000, scoped, tag = 'input window, operand 1, single buffered']
    #allocation6 [shape = 's32[1]{0}', space=sflag, size = 0x4, scoped, tag = 'scoped memory for tpu_custom_call.1']
    %11 = vsyncpa [#allocation4], 0
    %12 = vsyncpa [#allocation6], 0
    // Predicated region
    $region2: #{tpu_custom_call.1} parent=1 // pred_check
      _
    $region3: #{tpu_custom_call.1} parent=1 // pred_check_branch
      %14 = sbr.rel (0) target = $region5
    $region4: #{tpu_custom_call.1} parent=1 // pred_region
      %16 = vsyncadd [#allocation4], 0
      %s18 = sshll.u32 %s0, 4
      %s19 = int_to_ptr.hbm [resolvable:$true] %s18
      %s20 = sshll.u32 [#allocation3], 4
      %s21 = int_to_ptr.vmem [resolvable:$true] %s20
      %23 = dma.hbm_to_vmem [thread:$0]  %s19, 128, %s21, [#allocation4]
    $region5: #{tpu_custom_call.1} parent=1 // pred_fallthru
      _
    // Predicated region
    $region6: #{tpu_custom_call.1} parent=1 // pred_check
      _
    $region7: #{tpu_custom_call.1} parent=1 // pred_check_branch
      %25 = sbr.rel (0) target = $region9
    $region8: #{tpu_custom_call.1} parent=1 // pred_region
      %27 = vsyncadd [#allocation6], 0
      %s28 = sshll.u32 %s1, 4
      %s29 = int_to_ptr.hbm [resolvable:$true] %s28
      %s30 = sshll.u32 [#allocation5], 4
      %s31 = int_to_ptr.vmem [resolvable:$true] %s30
      %36 = dma.hbm_to_vmem [thread:$0]  %s29, 256, %s31, [#allocation6], 128, 128, 8
    $region9: #{tpu_custom_call.1} parent=1 // pred_fallthru
      _
    // Predicated region
    $region10: #{tpu_custom_call.1} parent=1 // pred_check
      _
    $region11: #{tpu_custom_call.1} parent=1 // pred_check_branch
      %38 = sbr.rel (0) target = $region13
    $region12: #{tpu_custom_call.1} parent=1 // pred_region
      _
    $region13: #{tpu_custom_call.1} parent=1 // pred_fallthru
      _
    // Predicated region
    $region14: #{tpu_custom_call.1} parent=1 // pred_check
      _
    $region15: #{tpu_custom_call.1} parent=1 // pred_check_branch
      %40 = sbr.rel (0) target = $region17
    $region16: #{tpu_custom_call.1} parent=1 // pred_region
      _
    $region17: #{tpu_custom_call.1} parent=1 // pred_fallthru
      _
    // Predicated region
    $region18: #{tpu_custom_call.1} parent=1 // pred_check
      _
    $region19: #{tpu_custom_call.1} parent=1 // pred_check_branch
      %42 = sbr.rel (0) target = $region21
    $region20: #{tpu_custom_call.1} parent=1 // pred_region
      _
    $region21: #{tpu_custom_call.1} parent=1 // pred_fallthru
      _
    // Predicated region
    $region22: #{tpu_custom_call.1} parent=1 // pred_check
      _
    $region23: #{tpu_custom_call.1} parent=1 // pred_check_branch
      %44 = sbr.rel (0) target = $region25
    $region24: #{tpu_custom_call.1} parent=1 // pred_region
      %46 = dma.done [#allocation4], 128
    $region25: #{tpu_custom_call.1} parent=1 // pred_fallthru
      _
    // Predicated region
    $region26: #{tpu_custom_call.1} parent=1 // pred_check
      _
    $region27: #{tpu_custom_call.1} parent=1 // pred_check_branch
      %48 = sbr.rel (0) target = $region29
    $region28: #{tpu_custom_call.1} parent=1 // pred_region
      %50 = dma.done [#allocation6], 256
    $region29: #{tpu_custom_call.1} parent=1 // pred_fallthru
      _
    %v51 = vld [vmem:[#allocation3] sm:$0xff]
    %v52 = vld [vmem:[#allocation5] sm:$0xff]
    %v53 = vld [vmem:[#allocation5 + $0x8] sm:$0x3]
    %v54 = vld [vmem:[%s2] sm:$0x1]
    %v56 = vperm.slane %v54, 0
    %vm58 = vcmask 80896
    %v60 = vsel %vm58, %v51, 0
    %vm62 = vcmask 1041408
    %v64 = vsel %vm62, %v53, 0
    %66 = vmatpush.msra.mxu0 0.0
    %67 = vmatpush.msra.mxu0 0.0
    %68 = vmatpush.msra.mxu0 0.0
    %69 = vmatpush.msra.mxu0 0.0
    %70 = vmatpush.msra.mxu0 0.0
    %71 = vmatpush.msra.mxu0 0.0
    %72 = vmatpush.msra.mxu0 0.0
    %73 = vmatpush.msra.mxu0 0.0
    %74 = vmatpush.msra.mxu0 0.0
    %75 = vmatpush.msra.mxu0 0.0
    %76 = vmatpush.msra.mxu0 0.0
    %77 = vmatpush.msra.mxu0 0.0
    %78 = vmatpush.msra.mxu0 0.0
    %79 = vmatpush.msra.mxu0 0.0
    %80 = vmatpush.msra.mxu0 %v64
    %81 = vmatpush.msra.mxu0 %v52
    %82 = vmatmul.f32.gmra.mxu0 %v60
    %v83 = vpop.f32.mrf.mxu0
    %v84 = vadd.f32 %v56, %v83
    %85 = vdwg.mxu0
    %v86 = vxor.u32 %v84, 2147483648
    %v87 = vmul.f32 %v86, 1.442695
    %v88 = vpow.pop %v87
    %v89 = vadd.f32 %v88, 1.0
    %v90 = vrcp.pop %v89
    %v91 = vmul.f32 %v89, %v90
    %v92 = vsub.f32 1.0, %v91
    %v93 = vmul.f32 %v90, %v92
    %v94 = vadd.f32 %v90, %v93
    %vm95 = vweird.f32 %v89
    %vm96 = vweird.f32 %v90
    %vm97 = vmor %vm95, %vm96
    %v98 = vsel %vm97, %v90, %v94
    %v99 = vand.u32 2147483647, %v89
    %vm100 = vcmp.eq.f32.partialorder %v99, 8.507059e+37
    %v101 = vand.u32 %v89, 2147483648
    %v102 = vor.u32 1.1754944e-38, %v101
    %v103 = vsel %vm100, %v102, %v98
    %v104 = vmul.f32 1.0, %v103
    %v105 = vld [vmem:[%s3] sm:$0x1]
    %v107 = vperm.slane %v105, 0
    %v109 = vmul.f32 %v104, %v107
    %vm110 = vcmask 261120
    %v111 = vsel %vm110, %v109, 0.0
    %112 = vadd.xlane.f32.xlu0 %v111
    %v113 = vpop.xlane.xlu0 %112
    %s114 = sld [smem:[#allocation2]]
    %v115 = vstv %s114
    %v116 = vadd.f32 %v113, %v115
    %vm117 = vcmask 7168
    %118 = vst.msk [vmem:[%s5] sm:$0xff] %vm117, %v116
    // Predicated region
    $region30: #{tpu_custom_call.1} parent=1 // pred_check
      _
    $region31: #{tpu_custom_call.1} parent=1 // pred_check_branch
      %120 = sbr.rel (0) target = $region33
    $region32: #{tpu_custom_call.1} parent=1 // pred_region
      _
    $region33: #{tpu_custom_call.1} parent=1 // pred_fallthru
      _
    // Predicated region
    $region34: #{tpu_custom_call.1} parent=1 // pred_check
      _
    $region35: #{tpu_custom_call.1} parent=1 // pred_check_branch
      %122 = sbr.rel (0) target = $region37
    $region36: #{tpu_custom_call.1} parent=1 // pred_region
      _
    $region37: #{tpu_custom_call.1} parent=1 // pred_fallthru
      _
    %123 = vsyncpa [#allocation4], 1
    %124 = vsyncpa [#allocation6], 1

</llo_original>
